<compile_context>
chip_gen: v6e
topology: v6e:2x2x1
jax: 0.10.0
libtpu: 0.0.40
codegen_flags: <defaults>
</compile_context>

<pallas_src>
import functools

import jax
import jax.numpy as jnp
from jax.experimental import pallas as pl
from jax.experimental.pallas import tpu as pltpu


def _round_up(n, m):
    return ((n + m - 1) // m) * m


def rnn_kernel(x_ref, params_ref, rhs_ref, out_ref):
    # x_ref      : [BP, S]         f32  (batch rows zero-padded)
    # params_ref : [BP, 2*HP+CP]   f32  ([u_row | bh | bp], sublane-replicated)
    # rhs_ref    : [HP, HP+CP]     bf16 ([W | V.T], zero-padded)
    # out_ref    : [BP, HP+CP]     f32  ([h_final | logits])
    HP = rhs_ref.shape[0]
    CP = rhs_ref.shape[1] - HP
    S = x_ref.shape[1]

    x = x_ref[...]                                   # [BP, S]
    u_bc = params_ref[:, 0:HP]                       # [BP, HP]
    bh_bc = params_ref[:, HP:2 * HP]                 # [BP, HP]
    bp_bc = params_ref[:, 2 * HP:2 * HP + CP]        # [BP, CP]
    w_bf = rhs_ref[:, 0:HP]                          # [HP, HP]  bf16
    vT_bf = rhs_ref[:, HP:HP + CP]                   # [HP, CP]  bf16

    # ---- Hoisted input projection + bias (off the serial chain) -------------
    # xpre[t] = x[:, t] * U.T + bh  -> lane-dense [BP, HP] tiles, computed
    # before the recurrence so the per-step body is only h@W + add + tanh.
    xpre = [x[:, t:t + 1] * u_bc + bh_bc for t in range(S)]

    # ---- Serial recurrence (static unroll, S is small & static) -------------
    # Step 0: h_prev == 0, so h@W == 0 and is skipped.
    h = jnp.tanh(xpre[0])
    for t in range(1, S):
        hw = jnp.dot(h.astype(jnp.bfloat16), w_bf,
                     preferred_element_type=jnp.float32)
        h = jnp.tanh(xpre[t] + hw)

    # ---- Classifier projection ----------------------------------------------
    logits = jnp.dot(h.astype(jnp.bfloat16), vT_bf,
                     preferred_element_type=jnp.float32) + bp_bc

    # Single lane-dense output slab: [:, :HP] = h_final, [:, HP:] = logits.
    out_ref[:, 0:HP] = h
    out_ref[:, HP:HP + CP] = logits


def prepare_rnn_params(U, W, V, bh, bp, *, batch_pad=16):
    """One-time padding / casting / packing of the static parameters.

    Returns (params_slab_f32, rhs_slab_bf16, dims). The per-call forward pass
    only has to build the padded x slab.
    """
    H, I = U.shape
    assert I == 1, "kernel implements the input_dim == 1 path of the module"
    C = V.shape[0]

    BP = _round_up(max(batch_pad, 8), 8)   # sublane-pad batch (full bf16 LHS tile)
    HP = _round_up(H, 128)                 # lane-pad hidden
    CP = _round_up(C, 128)                 # lane-pad classes
    f32 = jnp.float32

    # [ u_row | bh | bp ] f32 slab, replicated across all BP sublanes so the
    # kernel needs no sublane broadcasts.
    row = jnp.zeros((1, 2 * HP + CP), f32)
    row = row.at[0, 0:H].set(U[:, 0].astype(f32))
    row = row.at[0, HP:HP + H].set(bh.astype(f32))
    row = row.at[0, 2 * HP:2 * HP + C].set(bp.astype(f32))
    params = jnp.broadcast_to(row, (BP, 2 * HP + CP)) + jnp.zeros((BP, 1), f32)

    # [ W | V.T ] bf16 slab (zero-padded rows/cols keep padded lanes exactly 0).
    rhs = jnp.zeros((HP, HP + CP), jnp.bfloat16)
    rhs = rhs.at[:H, :H].set(W.astype(jnp.bfloat16))
    rhs = rhs.at[:H, HP:HP + C].set(V.T.astype(jnp.bfloat16))

    dims = {"B_pad": BP, "H": H, "HP": HP, "C": C, "CP": CP}
    return params, rhs, dims


@functools.partial(jax.jit, static_argnames=("B", "S", "H", "C", "BP", "HP", "CP"))
def _rnn_call(x, params, rhs, *, B, S, H, C, BP, HP, CP):
    # Per-call work: pad x, run the kernel, slice the output slab.
    x_p = jnp.zeros((BP, S), jnp.float32).at[:B, :].set(x.astype(jnp.float32))
    slab = pl.pallas_call(
        rnn_kernel,
        out_shape=jax.ShapeDtypeStruct((BP, HP + CP), jnp.float32),
        in_specs=[pl.BlockSpec(memory_space=pltpu.MemorySpace.VMEM)] * 3,
        out_specs=pl.BlockSpec(memory_space=pltpu.MemorySpace.VMEM),
    )(x_p, params, rhs)
    return slab[:B, :H], slab[:B, HP:HP + C]


def vanilla_rnn_forward(x, W, prepared):
    """Returns (W, hidden_state_final, output) like the PyTorch module."""
    params, rhs, d = prepared
    B, S = x.shape
    h, out = _rnn_call(x, params, rhs, B=B, S=S, H=d["H"], C=d["C"],
                       BP=d["B_pad"], HP=d["HP"], CP=d["CP"])
    return W, h, out


# ----------------------------- references ------------------------------------
def ref_forward_f32(x, U, W, V, bh, bp):
    """Pure-JAX f32 reference replicating the PyTorch forward exactly."""
    S = x.shape[1]
    I = U.shape[1]
    h = jnp.zeros_like(bh)
    for t in range(S):
        xt = x[:, t:t + I]
        h = jnp.tanh(xt @ U.T + h @ W + bh)
    out = h @ V.T + bp
    return W, h, out


def ref_forward_mixed(x, U, W, V, bh, bp):
    """Pure-JAX reference mirroring the kernel numerics (bf16 at dot inputs,
    f32 accumulation & elementwise) — tight-tolerance check of the kernel."""
    bf = jnp.bfloat16
    S = x.shape[1]
    W_bf = W.astype(bf)
    VT_bf = V.T.astype(bf)
    u_row = U[:, 0].astype(jnp.float32)[None, :]          # [1, H]
    h = jnp.tanh(x[:, 0:1] * u_row + bh)
    for t in range(1, S):
        hw = jnp.dot(h.astype(bf), W_bf, preferred_element_type=jnp.float32)
        h = jnp.tanh((x[:, t:t + 1] * u_row + bh) + hw)
    out = jnp.dot(h.astype(bf), VT_bf, preferred_element_type=jnp.float32) + bp
    return h, out


def xavier_normal(key, shape):
    fan_out, fan_in = shape
    std = (2.0 / (fan_in + fan_out)) ** 0.5
    return std * jax.random.normal(key, shape, dtype=jnp.float32)


if __name__ == "__main__":
    # Small shapes consistent with the module: input_dim=1 (the only value for
    # which x[:, t:t+input_dim] walks the sequence), batch=2, seq=8, hidden=32,
    # classes=10.
    batch, seq = 2, 8
    input_dim, num_hidden, num_classes = 1, 32, 10

    key = jax.random.PRNGKey(0)
    k_x, k_u, k_v, k_w = jax.random.split(key, 4)

    x = jax.random.normal(k_x, (batch, seq), dtype=jnp.float32)
    U = xavier_normal(k_u, (num_hidden, input_dim))
    V = xavier_normal(k_v, (num_classes, num_hidden))
    W = xavier_normal(k_w, (num_hidden, num_hidden))
    bh = jnp.zeros((num_hidden,), jnp.float32)
    bp = jnp.zeros((num_classes,), jnp.float32)

    # One-time parameter prep (padding / bf16 cast / packing) at "module init".
    prepared = prepare_rnn_params(U, W, V, bh, bp)
    jax.block_until_ready(prepared[:2])

    W_out, h_out, out = vanilla_rnn_forward(x, W, prepared)
    jax.block_until_ready((W_out, h_out, out))

    # Shape / passthrough checks.
    assert h_out.shape == (batch, num_hidden)
    assert out.shape == (batch, num_classes)
    assert jnp.array_equal(W_out, W)

    # Tight check: kernel matches the same-numerics (bf16-at-dot) reference.
    h_mx, out_mx = ref_forward_mixed(x, U, W, V, bh, bp)
    assert jnp.allclose(h_out, h_mx, atol=1e-3, rtol=1e-3)
    assert jnp.allclose(out, out_mx, atol=1e-3, rtol=1e-3)

    # Sanity check: kernel stays close to the pure-f32 reference despite bf16
    # MXU inputs accumulated over 8 recurrent steps.
    _, h_f32, out_f32 = ref_forward_f32(x, U, W, V, bh, bp)
    assert jnp.allclose(h_out, h_f32, atol=3e-2, rtol=3e-2)
    assert jnp.allclose(out, out_f32, atol=3e-2, rtol=3e-2)

    print("KERNEL_OK")
</pallas_src>

<mosaic_0001>
module attributes {stable_mosaic.version = 11 : i64} {
  func.func @rnn_kernel(%arg0: memref<16x8xf32, #tpu.memory_space<vmem>>, %arg1: memref<16x384xf32, #tpu.memory_space<vmem>>, %arg2: memref<128x256xbf16, #tpu.memory_space<vmem>>, %arg3: memref<16x256xf32, #tpu.memory_space<vmem>>) attributes {dimension_semantics = [], scalar_prefetch = 0 : i64, scratch_operands = 0 : i64, tpu.core_type = #tpu.core_type<tc>} {
    %c0 = arith.constant 0 : index
    %c0_0 = arith.constant 0 : index
    %0 = vector.load %arg0[%c0, %c0_0] : memref<16x8xf32, #tpu.memory_space<vmem>>, vector<16x8xf32>
    %c0_1 = arith.constant 0 : index
    %c0_2 = arith.constant 0 : index
    %1 = vector.load %arg1[%c0_1, %c0_2] : memref<16x384xf32, #tpu.memory_space<vmem>>, vector<16x128xf32>
    %c0_3 = arith.constant 0 : index
    %c128 = arith.constant 128 : index
    %2 = vector.load %arg1[%c0_3, %c128] : memref<16x384xf32, #tpu.memory_space<vmem>>, vector<16x128xf32>
    %c0_4 = arith.constant 0 : index
    %c256 = arith.constant 256 : index
    %3 = vector.load %arg1[%c0_4, %c256] : memref<16x384xf32, #tpu.memory_space<vmem>>, vector<16x128xf32>
    %c0_5 = arith.constant 0 : index
    %c0_6 = arith.constant 0 : index
    %4 = vector.load %arg2[%c0_5, %c0_6] : memref<128x256xbf16, #tpu.memory_space<vmem>>, vector<128x128xbf16>
    %c0_7 = arith.constant 0 : index
    %c128_8 = arith.constant 128 : index
    %5 = vector.load %arg2[%c0_7, %c128_8] : memref<128x256xbf16, #tpu.memory_space<vmem>>, vector<128x128xbf16>
    %6 = vector.extract_strided_slice %0 {offsets = [0, 0], sizes = [16, 1], strides = [1, 1]} : vector<16x8xf32> to vector<16x1xf32>
    %7 = vector.broadcast %6 : vector<16x1xf32> to vector<16x128xf32>
    %8 = arith.mulf %7, %1 : vector<16x128xf32>
    %9 = arith.addf %8, %2 : vector<16x128xf32>
    %10 = vector.extract_strided_slice %0 {offsets = [0, 1], sizes = [16, 1], strides = [1, 1]} : vector<16x8xf32> to vector<16x1xf32>
    %11 = vector.broadcast %10 : vector<16x1xf32> to vector<16x128xf32>
    %12 = arith.mulf %11, %1 : vector<16x128xf32>
    %13 = arith.addf %12, %2 : vector<16x128xf32>
    %14 = vector.extract_strided_slice %0 {offsets = [0, 2], sizes = [16, 1], strides = [1, 1]} : vector<16x8xf32> to vector<16x1xf32>
    %15 = vector.broadcast %14 : vector<16x1xf32> to vector<16x128xf32>
    %16 = arith.mulf %15, %1 : vector<16x128xf32>
    %17 = arith.addf %16, %2 : vector<16x128xf32>
    %18 = vector.extract_strided_slice %0 {offsets = [0, 3], sizes = [16, 1], strides = [1, 1]} : vector<16x8xf32> to vector<16x1xf32>
    %19 = vector.broadcast %18 : vector<16x1xf32> to vector<16x128xf32>
    %20 = arith.mulf %19, %1 : vector<16x128xf32>
    %21 = arith.addf %20, %2 : vector<16x128xf32>
    %22 = vector.extract_strided_slice %0 {offsets = [0, 4], sizes = [16, 1], strides = [1, 1]} : vector<16x8xf32> to vector<16x1xf32>
    %23 = vector.broadcast %22 : vector<16x1xf32> to vector<16x128xf32>
    %24 = arith.mulf %23, %1 : vector<16x128xf32>
    %25 = arith.addf %24, %2 : vector<16x128xf32>
    %26 = vector.extract_strided_slice %0 {offsets = [0, 5], sizes = [16, 1], strides = [1, 1]} : vector<16x8xf32> to vector<16x1xf32>
    %27 = vector.broadcast %26 : vector<16x1xf32> to vector<16x128xf32>
    %28 = arith.mulf %27, %1 : vector<16x128xf32>
    %29 = arith.addf %28, %2 : vector<16x128xf32>
    %30 = vector.extract_strided_slice %0 {offsets = [0, 6], sizes = [16, 1], strides = [1, 1]} : vector<16x8xf32> to vector<16x1xf32>
    %31 = vector.broadcast %30 : vector<16x1xf32> to vector<16x128xf32>
    %32 = arith.mulf %31, %1 : vector<16x128xf32>
    %33 = arith.addf %32, %2 : vector<16x128xf32>
    %34 = vector.extract_strided_slice %0 {offsets = [0, 7], sizes = [16, 1], strides = [1, 1]} : vector<16x8xf32> to vector<16x1xf32>
    %35 = vector.broadcast %34 : vector<16x1xf32> to vector<16x128xf32>
    %36 = arith.mulf %35, %1 : vector<16x128xf32>
    %37 = arith.addf %36, %2 : vector<16x128xf32>
    %38 = math.tanh %9 : vector<16x128xf32>
    %39 = arith.truncf %38 : vector<16x128xf32> to vector<16x128xbf16>
    %cst = arith.constant dense<0.000000e+00> : vector<16x128xf32>
    %40 = tpu.matmul %39, %4, %cst {dimension_numbers = #tpu.dot_dimension_numbers<[1], [0], [0], [1], [0, 0, 1, 1], [], []>} : vector<16x128xbf16>, vector<128x128xbf16>, vector<16x128xf32> -> vector<16x128xf32>
    %41 = arith.addf %13, %40 : vector<16x128xf32>
    %42 = math.tanh %41 : vector<16x128xf32>
    %43 = arith.truncf %42 : vector<16x128xf32> to vector<16x128xbf16>
    %cst_9 = arith.constant dense<0.000000e+00> : vector<16x128xf32>
    %44 = tpu.matmul %43, %4, %cst_9 {dimension_numbers = #tpu.dot_dimension_numbers<[1], [0], [0], [1], [0, 0, 1, 1], [], []>} : vector<16x128xbf16>, vector<128x128xbf16>, vector<16x128xf32> -> vector<16x128xf32>
    %45 = arith.addf %17, %44 : vector<16x128xf32>
    %46 = math.tanh %45 : vector<16x128xf32>
    %47 = arith.truncf %46 : vector<16x128xf32> to vector<16x128xbf16>
    %cst_10 = arith.constant dense<0.000000e+00> : vector<16x128xf32>
    %48 = tpu.matmul %47, %4, %cst_10 {dimension_numbers = #tpu.dot_dimension_numbers<[1], [0], [0], [1], [0, 0, 1, 1], [], []>} : vector<16x128xbf16>, vector<128x128xbf16>, vector<16x128xf32> -> vector<16x128xf32>
    %49 = arith.addf %21, %48 : vector<16x128xf32>
    %50 = math.tanh %49 : vector<16x128xf32>
    %51 = arith.truncf %50 : vector<16x128xf32> to vector<16x128xbf16>
    %cst_11 = arith.constant dense<0.000000e+00> : vector<16x128xf32>
    %52 = tpu.matmul %51, %4, %cst_11 {dimension_numbers = #tpu.dot_dimension_numbers<[1], [0], [0], [1], [0, 0, 1, 1], [], []>} : vector<16x128xbf16>, vector<128x128xbf16>, vector<16x128xf32> -> vector<16x128xf32>
    %53 = arith.addf %25, %52 : vector<16x128xf32>
    %54 = math.tanh %53 : vector<16x128xf32>
    %55 = arith.truncf %54 : vector<16x128xf32> to vector<16x128xbf16>
    %cst_12 = arith.constant dense<0.000000e+00> : vector<16x128xf32>
    %56 = tpu.matmul %55, %4, %cst_12 {dimension_numbers = #tpu.dot_dimension_numbers<[1], [0], [0], [1], [0, 0, 1, 1], [], []>} : vector<16x128xbf16>, vector<128x128xbf16>, vector<16x128xf32> -> vector<16x128xf32>
    %57 = arith.addf %29, %56 : vector<16x128xf32>
    %58 = math.tanh %57 : vector<16x128xf32>
    %59 = arith.truncf %58 : vector<16x128xf32> to vector<16x128xbf16>
    %cst_13 = arith.constant dense<0.000000e+00> : vector<16x128xf32>
    %60 = tpu.matmul %59, %4, %cst_13 {dimension_numbers = #tpu.dot_dimension_numbers<[1], [0], [0], [1], [0, 0, 1, 1], [], []>} : vector<16x128xbf16>, vector<128x128xbf16>, vector<16x128xf32> -> vector<16x128xf32>
    %61 = arith.addf %33, %60 : vector<16x128xf32>
    %62 = math.tanh %61 : vector<16x128xf32>
    %63 = arith.truncf %62 : vector<16x128xf32> to vector<16x128xbf16>
    %cst_14 = arith.constant dense<0.000000e+00> : vector<16x128xf32>
    %64 = tpu.matmul %63, %4, %cst_14 {dimension_numbers = #tpu.dot_dimension_numbers<[1], [0], [0], [1], [0, 0, 1, 1], [], []>} : vector<16x128xbf16>, vector<128x128xbf16>, vector<16x128xf32> -> vector<16x128xf32>
    %65 = arith.addf %37, %64 : vector<16x128xf32>
    %66 = math.tanh %65 : vector<16x128xf32>
    %67 = arith.truncf %66 : vector<16x128xf32> to vector<16x128xbf16>
    %cst_15 = arith.constant dense<0.000000e+00> : vector<16x128xf32>
    %68 = tpu.matmul %67, %5, %cst_15 {dimension_numbers = #tpu.dot_dimension_numbers<[1], [0], [0], [1], [0, 0, 1, 1], [], []>} : vector<16x128xbf16>, vector<128x128xbf16>, vector<16x128xf32> -> vector<16x128xf32>
    %69 = arith.addf %68, %3 : vector<16x128xf32>
    %c0_16 = arith.constant 0 : index
    %c0_17 = arith.constant 0 : index
    %70 = vector.load %arg3[%c0_16, %c0_17] : memref<16x256xf32, #tpu.memory_space<vmem>>, vector<16x128xf32>
    tpu.vector_store %arg3[%c0_16, %c0_17], %66 {strides = array<i32>} : memref<16x256xf32, #tpu.memory_space<vmem>>, vector<16x128xf32>,
    %c0_18 = arith.constant 0 : index
    %c128_19 = arith.constant 128 : index
    %71 = vector.load %arg3[%c0_18, %c128_19] : memref<16x256xf32, #tpu.memory_space<vmem>>, vector<16x128xf32>
    tpu.vector_store %arg3[%c0_18, %c128_19], %69 {strides = array<i32>} : memref<16x256xf32, #tpu.memory_space<vmem>>, vector<16x128xf32>,
    return
  }
}

</mosaic_0001>

<llo_original>
// kernel: _rnn_call.1
$region0: #{_rnn_call.1}
  #allocation0 [shape = 'u32[]', space=smem, size = 0x4, offset = 0x4, fixed_abs, tag = 'smem constant byte address 0x4 - core index']
  #allocation1 [shape = 'u32[144,128]{1,0:T(1,128)}', space=vmem, size = 0x12000, scoped, tag = 'internal scratch']
  %s0 = inlined_call_operand.vmem [shape: f32[16,8], index: 0, kind: input, shape index: {}]
  %s1 = inlined_call_operand.hbm [shape: f32[16,384], index: 1, kind: input, shape index: {}]
  %s2 = inlined_call_operand.hbm [shape: bf16[128,256], index: 2, kind: input, shape index: {}]
  %s3 = inlined_call_operand.vmem [shape: f32[16,256], index: 3, kind: output, shape index: {}]
  %s4 = sld [smem:[#allocation0]]
  $region30: #{_rnn_call.1} parent=0
    _
  %s6 = ssub.s32 1, %s4
  %s7 = scalar_select 0, %s6, %s4
  $region1: #{_rnn_call.1} parent=0
    #allocation2 [shape = 'u8[24576]{0}', space=vmem, size = 0x6000, scoped, tag = 'input window, operand 1, single buffered']
    #allocation3 [shape = 's32[1]{0}', space=sflag, size = 0x4, scoped, tag = 'scoped memory for _rnn_call.1']
    #allocation4 [shape = 'u8[65536]{0}', space=vmem, size = 0x10000, scoped, tag = 'input window, operand 2, single buffered']
    #allocation5 [shape = 's32[1]{0}', space=sflag, size = 0x4, scoped, tag = 'scoped memory for _rnn_call.1']
    %8 = vsyncpa [#allocation3], 0
    %9 = vsyncpa [#allocation5], 0
    // Predicated region
    $region2: #{_rnn_call.1} parent=1 // pred_check
      _
    $region3: #{_rnn_call.1} parent=1 // pred_check_branch
      %11 = sbr.rel (0) target = $region5
    $region4: #{_rnn_call.1} parent=1 // pred_region
      _
    $region5: #{_rnn_call.1} parent=1 // pred_fallthru
      _
    // Predicated region
    $region6: #{_rnn_call.1} parent=1 // pred_check
      _
    $region7: #{_rnn_call.1} parent=1 // pred_check_branch
      %13 = sbr.rel (0) target = $region9
    $region8: #{_rnn_call.1} parent=1 // pred_region
      %s15 = ssub.s32 768, 768
      %16 = vsyncadd [#allocation3], %s15
      %s17 = sshll.u32 [#allocation2], 4
      %s18 = int_to_ptr.vmem [resolvable:$true] %s17
      %23 = dma.hbm_to_vmem [thread:$0]  %s1, 768, %s18, [#allocation3], 384, 384, 24
    $region9: #{_rnn_call.1} parent=1 // pred_fallthru
      _
    // Predicated region
    $region10: #{_rnn_call.1} parent=1 // pred_check
      _
    $region11: #{_rnn_call.1} parent=1 // pred_check_branch
      %25 = sbr.rel (0) target = $region13
    $region12: #{_rnn_call.1} parent=1 // pred_region
      %s27 = ssub.s32 2048, 2048
      %28 = vsyncadd [#allocation5], %s27
      %s29 = sshll.u32 [#allocation4], 4
      %s30 = int_to_ptr.vmem [resolvable:$true] %s29
      %35 = dma.hbm_to_vmem [thread:$0]  %s2, 2048, %s30, [#allocation5], 128, 128, 8
    $region13: #{_rnn_call.1} parent=1 // pred_fallthru
      _
    // Predicated region
    $region14: #{_rnn_call.1} parent=1 // pred_check
      _
    $region15: #{_rnn_call.1} parent=1 // pred_check_branch
      %37 = sbr.rel (0) target = $region17
    $region16: #{_rnn_call.1} parent=1 // pred_region
      %38 = dma.done [#allocation3], 768
    $region17: #{_rnn_call.1} parent=1 // pred_fallthru
      _
    // Predicated region
    $region18: #{_rnn_call.1} parent=1 // pred_check
      _
    $region19: #{_rnn_call.1} parent=1 // pred_check_branch
      %40 = sbr.rel (0) target = $region21
    $region20: #{_rnn_call.1} parent=1 // pred_region
      %41 = dma.done [#allocation5], 2048
    $region21: #{_rnn_call.1} parent=1 // pred_fallthru
      _
    %v43 = vld [vmem:[%s0] sm:$0xff]
    %v44 = vld [vmem:[%s0 + $0x8] sm:$0xff]
    %v45 = vld [vmem:[#allocation2] sm:$0xff]
    %v46 = vld [vmem:[#allocation2 + $0x18] sm:$0xff]
    %v47 = vld [vmem:[#allocation2 + $0x8] sm:$0xff]
    %v48 = vld [vmem:[#allocation2 + $0x20] sm:$0xff]
    %v49 = vld [vmem:[#allocation2 + $0x10] sm:$0xff]
    %v50 = vld [vmem:[#allocation2 + $0x28] sm:$0xff]
    %v51 = vld [vmem:[#allocation4] sm:$0xf]
    %v52 = vld [vmem:[#allocation4 + $0x8] sm:$0xf]
    %v53 = vld [vmem:[#allocation4 + $0x10] sm:$0xf]
    %v54 = vld [vmem:[#allocation4 + $0x18] sm:$0xf]
    %v55 = vld [vmem:[#allocation4 + $0x20] sm:$0xf]
    %v56 = vld [vmem:[#allocation4 + $0x28] sm:$0xf]
    %v57 = vld [vmem:[#allocation4 + $0x30] sm:$0xf]
    %v58 = vld [vmem:[#allocation4 + $0x38] sm:$0xf]
    %v59 = vld [vmem:[#allocation4 + $0x40] sm:$0xf]
    %v60 = vld [vmem:[#allocation4 + $0x48] sm:$0xf]
    %v61 = vld [vmem:[#allocation4 + $0x50] sm:$0xf]
    %v62 = vld [vmem:[#allocation4 + $0x58] sm:$0xf]
    %v63 = vld [vmem:[#allocation4 + $0x60] sm:$0xf]
    %v64 = vld [vmem:[#allocation4 + $0x68] sm:$0xf]
    %v65 = vld [vmem:[#allocation4 + $0x70] sm:$0xf]
    %v66 = vld [vmem:[#allocation4 + $0x78] sm:$0xf]
    %v67 = vld [vmem:[#allocation4 + $0x4] sm:$0xf]
    %v68 = vld [vmem:[#allocation4 + $0xc] sm:$0xf]
    %v69 = vld [vmem:[#allocation4 + $0x14] sm:$0xf]
    %v70 = vld [vmem:[#allocation4 + $0x1c] sm:$0xf]
    %v71 = vld [vmem:[#allocation4 + $0x24] sm:$0xf]
    %v72 = vld [vmem:[#allocation4 + $0x2c] sm:$0xf]
    %v73 = vld [vmem:[#allocation4 + $0x34] sm:$0xf]
    %v74 = vld [vmem:[#allocation4 + $0x3c] sm:$0xf]
    %v75 = vld [vmem:[#allocation4 + $0x44] sm:$0xf]
    %v76 = vld [vmem:[#allocation4 + $0x4c] sm:$0xf]
    %v77 = vld [vmem:[#allocation4 + $0x54] sm:$0xf]
    %v78 = vld [vmem:[#allocation4 + $0x5c] sm:$0xf]
    %v79 = vld [vmem:[#allocation4 + $0x64] sm:$0xf]
    %v80 = vld [vmem:[#allocation4 + $0x6c] sm:$0xf]
    %v81 = vld [vmem:[#allocation4 + $0x74] sm:$0xf]
    %v82 = vld [vmem:[#allocation4 + $0x7c] sm:$0xf]
    %84 = vset.pattern.permute.xlu0 0
    %85 = vperm.xlu0 %84, %v43
    %v86 = vpop.permute.xlu0 %85
    %89 = vset.pattern.permute.xlu0 0
    %90 = vperm.xlu0 %89, %v44
    %v91 = vpop.permute.xlu0 %90
    %v93 = vmul.f32 %v86, %v45
    %v94 = vmul.f32 %v91, %v46
    %v95 = vadd.f32 %v93, %v47
    %v96 = vadd.f32 %v94, %v48
    %97 = vset.pattern.permute.xlu0 1
    %98 = vperm.xlu0 %97, %v43
    %v99 = vpop.permute.xlu0 %98
    %101 = vset.pattern.permute.xlu0 1
    %102 = vperm.xlu0 %101, %v44
    %v103 = vpop.permute.xlu0 %102
    %v105 = vmul.f32 %v99, %v45
    %v106 = vmul.f32 %v103, %v46
    %v107 = vadd.f32 %v105, %v47
    %v108 = vadd.f32 %v106, %v48
    %109 = vset.pattern.permute.xlu0 2
    %110 = vperm.xlu0 %109, %v43
    %v111 = vpop.permute.xlu0 %110
    %113 = vset.pattern.permute.xlu0 2
    %114 = vperm.xlu0 %113, %v44
    %v115 = vpop.permute.xlu0 %114
    %v117 = vmul.f32 %v111, %v45
    %v118 = vmul.f32 %v115, %v46
    %v119 = vadd.f32 %v117, %v47
    %v120 = vadd.f32 %v118, %v48
    %121 = vset.pattern.permute.xlu0 3
    %122 = vperm.xlu0 %121, %v43
    %v123 = vpop.permute.xlu0 %122
    %125 = vset.pattern.permute.xlu0 3
    %126 = vperm.xlu0 %125, %v44
    %v127 = vpop.permute.xlu0 %126
    %v129 = vmul.f32 %v123, %v45
    %v130 = vmul.f32 %v127, %v46
    %v131 = vadd.f32 %v129, %v47
    %v132 = vadd.f32 %v130, %v48
    %133 = vset.pattern.permute.xlu0 4
    %134 = vperm.xlu0 %133, %v43
    %v135 = vpop.permute.xlu0 %134
    %137 = vset.pattern.permute.xlu0 4
    %138 = vperm.xlu0 %137, %v44
    %v139 = vpop.permute.xlu0 %138
    %v141 = vmul.f32 %v135, %v45
    %v142 = vmul.f32 %v139, %v46
    %v143 = vadd.f32 %v141, %v47
    %v144 = vadd.f32 %v142, %v48
    %145 = vset.pattern.permute.xlu0 5
    %146 = vperm.xlu0 %145, %v43
    %v147 = vpop.permute.xlu0 %146
    %149 = vset.pattern.permute.xlu0 5
    %150 = vperm.xlu0 %149, %v44
    %v151 = vpop.permute.xlu0 %150
    %v153 = vmul.f32 %v147, %v45
    %v154 = vmul.f32 %v151, %v46
    %v155 = vadd.f32 %v153, %v47
    %v156 = vadd.f32 %v154, %v48
    %157 = vset.pattern.permute.xlu0 6
    %158 = vperm.xlu0 %157, %v43
    %v159 = vpop.permute.xlu0 %158
    %161 = vset.pattern.permute.xlu0 6
    %162 = vperm.xlu0 %161, %v44
    %v163 = vpop.permute.xlu0 %162
    %v165 = vmul.f32 %v159, %v45
    %v166 = vmul.f32 %v163, %v46
    %v167 = vadd.f32 %v165, %v47
    %v168 = vadd.f32 %v166, %v48
    %169 = vset.pattern.permute.xlu0 7
    %170 = vperm.xlu0 %169, %v43
    %v171 = vpop.permute.xlu0 %170
    %173 = vset.pattern.permute.xlu0 7
    %174 = vperm.xlu0 %173, %v44
    %v175 = vpop.permute.xlu0 %174
    %v177 = vmul.f32 %v171, %v45
    %v178 = vmul.f32 %v175, %v46
    %v179 = vadd.f32 %v177, %v47
    %v180 = vadd.f32 %v178, %v48
    %v181 = vtanh.pop %v95
    %v182 = vtanh.pop %v96
    %v183 = vpack.c.bf16 %v182, %v181
    %v200 = vunpack.c.l.b16 %v51
    %v201 = vunpack.c.l.b16 %v52
    %v202 = vunpack.c.l.b16 %v53
    %v203 = vunpack.c.l.b16 %v54
    %v204 = vunpack.c.l.b16 %v55
    %v205 = vunpack.c.l.b16 %v56
    %v206 = vunpack.c.l.b16 %v57
    %v207 = vunpack.c.l.b16 %v58
    %v208 = vunpack.c.l.b16 %v59
    %v209 = vunpack.c.l.b16 %v60
    %v210 = vunpack.c.l.b16 %v61
    %v211 = vunpack.c.l.b16 %v62
    %v212 = vunpack.c.l.b16 %v63
    %v213 = vunpack.c.l.b16 %v64
    %v214 = vunpack.c.l.b16 %v65
    %v215 = vunpack.c.l.b16 %v66
    %v216 = vpack.c.b16 %v201, %v200
    %v217 = vpack.c.b16 %v203, %v202
    %v218 = vpack.c.b16 %v205, %v204
    %v219 = vpack.c.b16 %v207, %v206
    %v220 = vpack.c.b16 %v209, %v208
    %v221 = vpack.c.b16 %v211, %v210
    %v222 = vpack.c.b16 %v213, %v212
    %v223 = vpack.c.b16 %v215, %v214
    %232 = vmatprep.subr.bf16.mxu0 0
    %233 = vmatpush1.bf16.msra.mxu0 %v223
    %234 = vmatprep.subr.bf16.mxu0 0
    %235 = vmatpush1.bf16.msra.mxu0 %v222
    %236 = vmatprep.subr.bf16.mxu0 0
    %237 = vmatpush1.bf16.msra.mxu0 %v221
    %238 = vmatprep.subr.bf16.mxu0 0
    %239 = vmatpush1.bf16.msra.mxu0 %v220
    %240 = vmatprep.subr.bf16.mxu0 0
    %241 = vmatpush1.bf16.msra.mxu0 %v219
    %242 = vmatprep.subr.bf16.mxu0 0
    %243 = vmatpush1.bf16.msra.mxu0 %v218
    %244 = vmatprep.subr.bf16.mxu0 0
    %245 = vmatpush1.bf16.msra.mxu0 %v217
    %246 = vmatprep.subr.bf16.mxu0 0
    %247 = vmatpush1.bf16.msra.mxu0 %v216
    %248 = vmatprep.subr.bf16.mxu0 0
    %249 = vmatpush2.bf16.msra.mxu0 0
    %250 = vmatprep.subr.bf16.mxu0 0
    %251 = vmatpush2.bf16.msra.mxu0 0
    %252 = vmatprep.subr.bf16.mxu0 0
    %253 = vmatpush2.bf16.msra.mxu0 0
    %254 = vmatprep.subr.bf16.mxu0 0
    %255 = vmatpush2.bf16.msra.mxu0 0
    %256 = vmatprep.subr.bf16.mxu0 0
    %257 = vmatpush2.bf16.msra.mxu0 0
    %258 = vmatprep.subr.bf16.mxu0 0
    %259 = vmatpush2.bf16.msra.mxu0 0
    %260 = vmatprep.subr.bf16.mxu0 0
    %261 = vmatpush2.bf16.msra.mxu0 0
    %262 = vmatprep.subr.bf16.mxu0 0
    %263 = vmatpush2.bf16.msra.mxu0 0
    %264 = vmatprep.mubr.bf16.mxu0 0
    %265 = vmatmul.mubr.bf16.gmra.mxu0 %v183
    %v266 = vpop.f32.mrf.mxu0
    %v267 = vadd.f32 0.0, %v266
    %v268 = vpop.f32.mrf.mxu0
    %v269 = vpop.f32.mrf.mxu0
    %v270 = vadd.f32 0.0, %v269
    %v271 = vpop.f32.mrf.mxu0
    %272 = vdwg.mxu0
    %v273 = vadd.f32 %v107, %v267
    %v274 = vadd.f32 %v108, %v270
    %v275 = vtanh.pop %v273
    %v276 = vtanh.pop %v274
    %v277 = vpack.c.bf16 %v276, %v275
    %278 = vmatprep.subr.bf16.mxu0 0
    %279 = vmatpush1.bf16.msra.mxu0 %v223
    %280 = vmatprep.subr.bf16.mxu0 0
    %281 = vmatpush1.bf16.msra.mxu0 %v222
    %282 = vmatprep.subr.bf16.mxu0 0
    %283 = vmatpush1.bf16.msra.mxu0 %v221
    %284 = vmatprep.subr.bf16.mxu0 0
    %285 = vmatpush1.bf16.msra.mxu0 %v220
    %286 = vmatprep.subr.bf16.mxu0 0
    %287 = vmatpush1.bf16.msra.mxu0 %v219
    %288 = vmatprep.subr.bf16.mxu0 0
    %289 = vmatpush1.bf16.msra.mxu0 %v218
    %290 = vmatprep.subr.bf16.mxu0 0
    %291 = vmatpush1.bf16.msra.mxu0 %v217
    %292 = vmatprep.subr.bf16.mxu0 0
    %293 = vmatpush1.bf16.msra.mxu0 %v216
    %294 = vmatprep.subr.bf16.mxu0 0
    %295 = vmatpush2.bf16.msra.mxu0 0
    %296 = vmatprep.subr.bf16.mxu0 0
    %297 = vmatpush2.bf16.msra.mxu0 0
    %298 = vmatprep.subr.bf16.mxu0 0
    %299 = vmatpush2.bf16.msra.mxu0 0
    %300 = vmatprep.subr.bf16.mxu0 0
    %301 = vmatpush2.bf16.msra.mxu0 0
    %302 = vmatprep.subr.bf16.mxu0 0
    %303 = vmatpush2.bf16.msra.mxu0 0
    %304 = vmatprep.subr.bf16.mxu0 0
    %305 = vmatpush2.bf16.msra.mxu0 0
    %306 = vmatprep.subr.bf16.mxu0 0
    %307 = vmatpush2.bf16.msra.mxu0 0
    %308 = vmatprep.subr.bf16.mxu0 0
    %309 = vmatpush2.bf16.msra.mxu0 0
    %310 = vmatprep.mubr.bf16.mxu0 0
    %311 = vmatmul.mubr.bf16.gmra.mxu0 %v277
    %v312 = vpop.f32.mrf.mxu0
    %v313 = vadd.f32 0.0, %v312
    %v314 = vpop.f32.mrf.mxu0
    %v315 = vpop.f32.mrf.mxu0
    %v316 = vadd.f32 0.0, %v315
    %v317 = vpop.f32.mrf.mxu0
    %318 = vdwg.mxu0
    %v319 = vadd.f32 %v119, %v313
    %v320 = vadd.f32 %v120, %v316
    %v321 = vtanh.pop %v319
    %v322 = vtanh.pop %v320
    %v323 = vpack.c.bf16 %v322, %v321
    %324 = vmatprep.subr.bf16.mxu0 0
    %325 = vmatpush1.bf16.msra.mxu0 %v223
    %326 = vmatprep.subr.bf16.mxu0 0
    %327 = vmatpush1.bf16.msra.mxu0 %v222
    %328 = vmatprep.subr.bf16.mxu0 0
    %329 = vmatpush1.bf16.msra.mxu0 %v221
    %330 = vmatprep.subr.bf16.mxu0 0
    %331 = vmatpush1.bf16.msra.mxu0 %v220
    %332 = vmatprep.subr.bf16.mxu0 0
    %333 = vmatpush1.bf16.msra.mxu0 %v219
    %334 = vmatprep.subr.bf16.mxu0 0
    %335 = vmatpush1.bf16.msra.mxu0 %v218
    %336 = vmatprep.subr.bf16.mxu0 0
    %337 = vmatpush1.bf16.msra.mxu0 %v217
    %338 = vmatprep.subr.bf16.mxu0 0
    %339 = vmatpush1.bf16.msra.mxu0 %v216
    %340 = vmatprep.subr.bf16.mxu0 0
    %341 = vmatpush2.bf16.msra.mxu0 0
    %342 = vmatprep.subr.bf16.mxu0 0
    %343 = vmatpush2.bf16.msra.mxu0 0
    %344 = vmatprep.subr.bf16.mxu0 0
    %345 = vmatpush2.bf16.msra.mxu0 0
    %346 = vmatprep.subr.bf16.mxu0 0
    %347 = vmatpush2.bf16.msra.mxu0 0
    %348 = vmatprep.subr.bf16.mxu0 0
    %349 = vmatpush2.bf16.msra.mxu0 0
    %350 = vmatprep.subr.bf16.mxu0 0
    %351 = vmatpush2.bf16.msra.mxu0 0
    %352 = vmatprep.subr.bf16.mxu0 0
    %353 = vmatpush2.bf16.msra.mxu0 0
    %354 = vmatprep.subr.bf16.mxu0 0
    %355 = vmatpush2.bf16.msra.mxu0 0
    %356 = vmatprep.mubr.bf16.mxu0 0
    %357 = vmatmul.mubr.bf16.gmra.mxu0 %v323
    %v358 = vpop.f32.mrf.mxu0
    %v359 = vadd.f32 0.0, %v358
    %v360 = vpop.f32.mrf.mxu0
    %v361 = vpop.f32.mrf.mxu0
    %v362 = vadd.f32 0.0, %v361
    %v363 = vpop.f32.mrf.mxu0
    %364 = vdwg.mxu0
    %v365 = vadd.f32 %v131, %v359
    %v366 = vadd.f32 %v132, %v362
    %v367 = vtanh.pop %v365
    %v368 = vtanh.pop %v366
    %v369 = vpack.c.bf16 %v368, %v367
    %370 = vmatprep.subr.bf16.mxu0 0
    %371 = vmatpush1.bf16.msra.mxu0 %v223
    %372 = vmatprep.subr.bf16.mxu0 0
    %373 = vmatpush1.bf16.msra.mxu0 %v222
    %374 = vmatprep.subr.bf16.mxu0 0
    %375 = vmatpush1.bf16.msra.mxu0 %v221
    %376 = vmatprep.subr.bf16.mxu0 0
    %377 = vmatpush1.bf16.msra.mxu0 %v220
    %378 = vmatprep.subr.bf16.mxu0 0
    %379 = vmatpush1.bf16.msra.mxu0 %v219
    %380 = vmatprep.subr.bf16.mxu0 0
    %381 = vmatpush1.bf16.msra.mxu0 %v218
    %382 = vmatprep.subr.bf16.mxu0 0
    %383 = vmatpush1.bf16.msra.mxu0 %v217
    %384 = vmatprep.subr.bf16.mxu0 0
    %385 = vmatpush1.bf16.msra.mxu0 %v216
    %386 = vmatprep.subr.bf16.mxu0 0
    %387 = vmatpush2.bf16.msra.mxu0 0
    %388 = vmatprep.subr.bf16.mxu0 0
    %389 = vmatpush2.bf16.msra.mxu0 0
    %390 = vmatprep.subr.bf16.mxu0 0
    %391 = vmatpush2.bf16.msra.mxu0 0
    %392 = vmatprep.subr.bf16.mxu0 0
    %393 = vmatpush2.bf16.msra.mxu0 0
    %394 = vmatprep.subr.bf16.mxu0 0
    %395 = vmatpush2.bf16.msra.mxu0 0
    %396 = vmatprep.subr.bf16.mxu0 0
    %397 = vmatpush2.bf16.msra.mxu0 0
    %398 = vmatprep.subr.bf16.mxu0 0
    %399 = vmatpush2.bf16.msra.mxu0 0
    %400 = vmatprep.subr.bf16.mxu0 0
    %401 = vmatpush2.bf16.msra.mxu0 0
    %402 = vmatprep.mubr.bf16.mxu0 0
    %403 = vmatmul.mubr.bf16.gmra.mxu0 %v369
    %v404 = vpop.f32.mrf.mxu0
    %v405 = vadd.f32 0.0, %v404
    %v406 = vpop.f32.mrf.mxu0
    %v407 = vpop.f32.mrf.mxu0
    %v408 = vadd.f32 0.0, %v407
    %v409 = vpop.f32.mrf.mxu0
    %410 = vdwg.mxu0
    %v411 = vadd.f32 %v143, %v405
    %v412 = vadd.f32 %v144, %v408
    %v413 = vtanh.pop %v411
    %v414 = vtanh.pop %v412
    %v415 = vpack.c.bf16 %v414, %v413
    %416 = vmatprep.subr.bf16.mxu0 0
    %417 = vmatpush1.bf16.msra.mxu0 %v223
    %418 = vmatprep.subr.bf16.mxu0 0
    %419 = vmatpush1.bf16.msra.mxu0 %v222
    %420 = vmatprep.subr.bf16.mxu0 0
    %421 = vmatpush1.bf16.msra.mxu0 %v221
    %422 = vmatprep.subr.bf16.mxu0 0
    %423 = vmatpush1.bf16.msra.mxu0 %v220
    %424 = vmatprep.subr.bf16.mxu0 0
    %425 = vmatpush1.bf16.msra.mxu0 %v219
    %426 = vmatprep.subr.bf16.mxu0 0
    %427 = vmatpush1.bf16.msra.mxu0 %v218
    %428 = vmatprep.subr.bf16.mxu0 0
    %429 = vmatpush1.bf16.msra.mxu0 %v217
    %430 = vmatprep.subr.bf16.mxu0 0
    %431 = vmatpush1.bf16.msra.mxu0 %v216
    %432 = vmatprep.subr.bf16.mxu0 0
    %433 = vmatpush2.bf16.msra.mxu0 0
    %434 = vmatprep.subr.bf16.mxu0 0
    %435 = vmatpush2.bf16.msra.mxu0 0
    %436 = vmatprep.subr.bf16.mxu0 0
    %437 = vmatpush2.bf16.msra.mxu0 0
    %438 = vmatprep.subr.bf16.mxu0 0
    %439 = vmatpush2.bf16.msra.mxu0 0
    %440 = vmatprep.subr.bf16.mxu0 0
    %441 = vmatpush2.bf16.msra.mxu0 0
    %442 = vmatprep.subr.bf16.mxu0 0
    %443 = vmatpush2.bf16.msra.mxu0 0
    %444 = vmatprep.subr.bf16.mxu0 0
    %445 = vmatpush2.bf16.msra.mxu0 0
    %446 = vmatprep.subr.bf16.mxu0 0
    %447 = vmatpush2.bf16.msra.mxu0 0
    %448 = vmatprep.mubr.bf16.mxu0 0
    %449 = vmatmul.mubr.bf16.gmra.mxu0 %v415
    %v450 = vpop.f32.mrf.mxu0
    %v451 = vadd.f32 0.0, %v450
    %v452 = vpop.f32.mrf.mxu0
    %v453 = vpop.f32.mrf.mxu0
    %v454 = vadd.f32 0.0, %v453
    %v455 = vpop.f32.mrf.mxu0
    %456 = vdwg.mxu0
    %v457 = vadd.f32 %v155, %v451
    %v458 = vadd.f32 %v156, %v454
    %v459 = vtanh.pop %v457
    %v460 = vtanh.pop %v458
    %v461 = vpack.c.bf16 %v460, %v459
    %462 = vmatprep.subr.bf16.mxu0 0
    %463 = vmatpush1.bf16.msra.mxu0 %v223
    %464 = vmatprep.subr.bf16.mxu0 0
    %465 = vmatpush1.bf16.msra.mxu0 %v222
    %466 = vmatprep.subr.bf16.mxu0 0
    %467 = vmatpush1.bf16.msra.mxu0 %v221
    %468 = vmatprep.subr.bf16.mxu0 0
    %469 = vmatpush1.bf16.msra.mxu0 %v220
    %470 = vmatprep.subr.bf16.mxu0 0
    %471 = vmatpush1.bf16.msra.mxu0 %v219
    %472 = vmatprep.subr.bf16.mxu0 0
    %473 = vmatpush1.bf16.msra.mxu0 %v218
    %474 = vmatprep.subr.bf16.mxu0 0
    %475 = vmatpush1.bf16.msra.mxu0 %v217
    %476 = vmatprep.subr.bf16.mxu0 0
    %477 = vmatpush1.bf16.msra.mxu0 %v216
    %478 = vmatprep.subr.bf16.mxu0 0
    %479 = vmatpush2.bf16.msra.mxu0 0
    %480 = vmatprep.subr.bf16.mxu0 0
    %481 = vmatpush2.bf16.msra.mxu0 0
    %482 = vmatprep.subr.bf16.mxu0 0
    %483 = vmatpush2.bf16.msra.mxu0 0
    %484 = vmatprep.subr.bf16.mxu0 0
    %485 = vmatpush2.bf16.msra.mxu0 0
    %486 = vmatprep.subr.bf16.mxu0 0
    %487 = vmatpush2.bf16.msra.mxu0 0
    %488 = vmatprep.subr.bf16.mxu0 0
    %489 = vmatpush2.bf16.msra.mxu0 0
    %490 = vmatprep.subr.bf16.mxu0 0
    %491 = vmatpush2.bf16.msra.mxu0 0
    %492 = vmatprep.subr.bf16.mxu0 0
    %493 = vmatpush2.bf16.msra.mxu0 0
    %494 = vmatprep.mubr.bf16.mxu0 0
    %495 = vmatmul.mubr.bf16.gmra.mxu0 %v461
    %v496 = vpop.f32.mrf.mxu0
    %v497 = vadd.f32 0.0, %v496
    %v498 = vpop.f32.mrf.mxu0
    %v499 = vpop.f32.mrf.mxu0
    %v500 = vadd.f32 0.0, %v499
    %v501 = vpop.f32.mrf.mxu0
    %502 = vdwg.mxu0
    %v503 = vadd.f32 %v167, %v497
    %v504 = vadd.f32 %v168, %v500
    %v505 = vtanh.pop %v503
    %v506 = vtanh.pop %v504
    %v507 = vpack.c.bf16 %v506, %v505
    %508 = vmatprep.subr.bf16.mxu0 0
    %509 = vmatpush1.bf16.msra.mxu0 %v223
    %510 = vmatprep.subr.bf16.mxu0 0
    %511 = vmatpush1.bf16.msra.mxu0 %v222
    %512 = vmatprep.subr.bf16.mxu0 0
    %513 = vmatpush1.bf16.msra.mxu0 %v221
    %514 = vmatprep.subr.bf16.mxu0 0
    %515 = vmatpush1.bf16.msra.mxu0 %v220
    %516 = vmatprep.subr.bf16.mxu0 0
    %517 = vmatpush1.bf16.msra.mxu0 %v219
    %518 = vmatprep.subr.bf16.mxu0 0
    %519 = vmatpush1.bf16.msra.mxu0 %v218
    %520 = vmatprep.subr.bf16.mxu0 0
    %521 = vmatpush1.bf16.msra.mxu0 %v217
    %522 = vmatprep.subr.bf16.mxu0 0
    %523 = vmatpush1.bf16.msra.mxu0 %v216
    %524 = vmatprep.subr.bf16.mxu0 0
    %525 = vmatpush2.bf16.msra.mxu0 0
    %526 = vmatprep.subr.bf16.mxu0 0
    %527 = vmatpush2.bf16.msra.mxu0 0
    %528 = vmatprep.subr.bf16.mxu0 0
    %529 = vmatpush2.bf16.msra.mxu0 0
    %530 = vmatprep.subr.bf16.mxu0 0
    %531 = vmatpush2.bf16.msra.mxu0 0
    %532 = vmatprep.subr.bf16.mxu0 0
    %533 = vmatpush2.bf16.msra.mxu0 0
    %534 = vmatprep.subr.bf16.mxu0 0
    %535 = vmatpush2.bf16.msra.mxu0 0
    %536 = vmatprep.subr.bf16.mxu0 0
    %537 = vmatpush2.bf16.msra.mxu0 0
    %538 = vmatprep.subr.bf16.mxu0 0
    %539 = vmatpush2.bf16.msra.mxu0 0
    %540 = vmatprep.mubr.bf16.mxu0 0
    %541 = vmatmul.mubr.bf16.gmra.mxu0 %v507
    %v542 = vpop.f32.mrf.mxu0
    %v543 = vadd.f32 0.0, %v542
    %v544 = vpop.f32.mrf.mxu0
    %v545 = vpop.f32.mrf.mxu0
    %v546 = vadd.f32 0.0, %v545
    %v547 = vpop.f32.mrf.mxu0
    %548 = vdwg.mxu0
    %v549 = vadd.f32 %v179, %v543
    %v550 = vadd.f32 %v180, %v546
    %v551 = vtanh.pop %v549
    %v552 = vtanh.pop %v550
    %v553 = vpack.c.bf16 %v552, %v551
    %v570 = vunpack.c.l.b16 %v67
    %v571 = vunpack.c.l.b16 %v68
    %v572 = vunpack.c.l.b16 %v69
    %v573 = vunpack.c.l.b16 %v70
    %v574 = vunpack.c.l.b16 %v71
    %v575 = vunpack.c.l.b16 %v72
    %v576 = vunpack.c.l.b16 %v73
    %v577 = vunpack.c.l.b16 %v74
    %v578 = vunpack.c.l.b16 %v75
    %v579 = vunpack.c.l.b16 %v76
    %v580 = vunpack.c.l.b16 %v77
    %v581 = vunpack.c.l.b16 %v78
    %v582 = vunpack.c.l.b16 %v79
    %v583 = vunpack.c.l.b16 %v80
    %v584 = vunpack.c.l.b16 %v81
    %v585 = vunpack.c.l.b16 %v82
    %v586 = vpack.c.b16 %v571, %v570
    %v587 = vpack.c.b16 %v573, %v572
    %v588 = vpack.c.b16 %v575, %v574
    %v589 = vpack.c.b16 %v577, %v576
    %v590 = vpack.c.b16 %v579, %v578
    %v591 = vpack.c.b16 %v581, %v580
    %v592 = vpack.c.b16 %v583, %v582
    %v593 = vpack.c.b16 %v585, %v584
    %602 = vmatprep.subr.bf16.mxu0 0
    %603 = vmatpush1.bf16.msra.mxu0 %v593
    %604 = vmatprep.subr.bf16.mxu0 0
    %605 = vmatpush1.bf16.msra.mxu0 %v592
    %606 = vmatprep.subr.bf16.mxu0 0
    %607 = vmatpush1.bf16.msra.mxu0 %v591
    %608 = vmatprep.subr.bf16.mxu0 0
    %609 = vmatpush1.bf16.msra.mxu0 %v590
    %610 = vmatprep.subr.bf16.mxu0 0
    %611 = vmatpush1.bf16.msra.mxu0 %v589
    %612 = vmatprep.subr.bf16.mxu0 0
    %613 = vmatpush1.bf16.msra.mxu0 %v588
    %614 = vmatprep.subr.bf16.mxu0 0
    %615 = vmatpush1.bf16.msra.mxu0 %v587
    %616 = vmatprep.subr.bf16.mxu0 0
    %617 = vmatpush1.bf16.msra.mxu0 %v586
    %618 = vmatprep.subr.bf16.mxu0 0
    %619 = vmatpush2.bf16.msra.mxu0 0
    %620 = vmatprep.subr.bf16.mxu0 0
    %621 = vmatpush2.bf16.msra.mxu0 0
    %622 = vmatprep.subr.bf16.mxu0 0
    %623 = vmatpush2.bf16.msra.mxu0 0
    %624 = vmatprep.subr.bf16.mxu0 0
    %625 = vmatpush2.bf16.msra.mxu0 0
    %626 = vmatprep.subr.bf16.mxu0 0
    %627 = vmatpush2.bf16.msra.mxu0 0
    %628 = vmatprep.subr.bf16.mxu0 0
    %629 = vmatpush2.bf16.msra.mxu0 0
    %630 = vmatprep.subr.bf16.mxu0 0
    %631 = vmatpush2.bf16.msra.mxu0 0
    %632 = vmatprep.subr.bf16.mxu0 0
    %633 = vmatpush2.bf16.msra.mxu0 0
    %634 = vmatprep.mubr.bf16.mxu0 0
    %635 = vmatmul.mubr.bf16.gmra.mxu0 %v553
    %v636 = vpop.f32.mrf.mxu0
    %v637 = vadd.f32 %v49, %v636
    %v638 = vpop.f32.mrf.mxu0
    %v639 = vpop.f32.mrf.mxu0
    %v640 = vadd.f32 %v50, %v639
    %v641 = vpop.f32.mrf.mxu0
    %642 = vdwg.mxu0
    %643 = vst [vmem:[%s3] sm:$0xff] %v551
    %644 = vst [vmem:[%s3 + $0x10] sm:$0xff] %v552
    %645 = vst [vmem:[%s3 + $0x8] sm:$0xff] %v637
    %646 = vst [vmem:[%s3 + $0x18] sm:$0xff] %v640
    // Predicated region
    $region22: #{_rnn_call.1} parent=1 // pred_check
      _
    $region23: #{_rnn_call.1} parent=1 // pred_check_branch
      %648 = sbr.rel (0) target = $region25
    $region24: #{_rnn_call.1} parent=1 // pred_region
      _
    $region25: #{_rnn_call.1} parent=1 // pred_fallthru
      _
    // Predicated region
    $region26: #{_rnn_call.1} parent=1 // pred_check
      _
    $region27: #{_rnn_call.1} parent=1 // pred_check_branch
      %650 = sbr.rel (0) target = $region29
    $region28: #{_rnn_call.1} parent=1 // pred_region
      _
    $region29: #{_rnn_call.1} parent=1 // pred_fallthru
      _
    %651 = vsyncpa [#allocation3], 1
    %652 = vsyncpa [#allocation5], 1

</llo_original>
